<compile_context>
chip_gen: v6e
topology: v6e:2x2x1
jax: 0.10.0
libtpu: 0.0.40
codegen_flags: <defaults>
</compile_context>

<pallas_src>
import jax
import jax.numpy as jnp
from jax.experimental import pallas as pl
from jax.experimental.pallas import tpu as pltpu

# ---- model dimensions (match the PyTorch module's __init__) ----
INPUT_SIZE = 14            # CustomKinematicNet input_size
HIDDEN_LAYERS = [64, 64]   # pretrained hidden_layers
ADD_INPUT_SIZE = 6         # additional_input_size
NEW_HIDDEN = [128, 128]    # new_hidden_layers
FEAT_DIM = HIDDEN_LAYERS[-1]           # layers[-3].out_features == 64
COMBINED = FEAT_DIM + ADD_INPUT_SIZE   # 70
XA_DIM = INPUT_SIZE + ADD_INPUT_SIZE   # 20 (fused x || additional_input stream)


def _round_up(n, m):
    return ((n + m - 1) // m) * m


def _linear_init(key, fan_in, fan_out):
    """Deterministic PyTorch-style U(-1/sqrt(fan_in), 1/sqrt(fan_in)) init."""
    kw, kb = jax.random.split(key)
    bound = 1.0 / jnp.sqrt(jnp.float32(fan_in))
    w = jax.random.uniform(kw, (fan_in, fan_out), jnp.float32, -bound, bound)
    b = jax.random.uniform(kb, (1, fan_out), jnp.float32, -bound, bound)
    return w, b


def init_params(seed=0):
    keys = jax.random.split(jax.random.PRNGKey(seed), 6)
    params = {}
    # frozen feature extractor (pretrained, last Linear removed)
    params["w1"], params["b1"] = _linear_init(keys[0], INPUT_SIZE, HIDDEN_LAYERS[0])
    params["w2"], params["b2"] = _linear_init(keys[1], HIDDEN_LAYERS[0], HIDDEN_LAYERS[1])
    # new layer 0: Linear(COMBINED, 128), split into feature / additional halves (exact concat fold)
    wn1, bn1 = _linear_init(keys[2], COMBINED, NEW_HIDDEN[0])
    params["wn1_feat"] = wn1[:FEAT_DIM, :]
    params["wn1_add"] = wn1[FEAT_DIM:, :]
    params["bn1"] = bn1
    # new layer 1: Linear(128, 128)
    params["wn2"], params["bn2"] = _linear_init(keys[3], NEW_HIDDEN[0], NEW_HIDDEN[1])
    # new layer 2 (head): Linear(128, 1)
    params["wn3"], params["bn3"] = _linear_init(keys[4], NEW_HIDDEN[1], 1)
    return params


def _prepare_kernel_params(params):
    """Cast weights once (wrapper-side) and reshape the head row for the VPU reduction."""
    bf16 = jnp.bfloat16
    f32 = jnp.float32
    return (
        params["w1"].astype(bf16), params["b1"].astype(f32),
        params["w2"].astype(bf16), params["b2"].astype(f32),
        params["wn1_feat"].astype(bf16), params["wn1_add"].astype(bf16),
        params["bn1"].astype(f32),
        params["wn2"].astype(bf16), params["bn2"].astype(f32),
        params["wn3"].astype(f32).T,          # (1, 128) row, used on the VPU
        params["bn3"].astype(f32),            # (1, 1)
    )


def _kernel(xa_ref,
            w1_ref, b1_ref, w2_ref, b2_ref,
            wn1f_ref, wn1a_ref, bn1_ref,
            wn2_ref, bn2_ref, wn3r_ref, bn3_ref,
            o_ref):
    f32 = jnp.float32
    bf16 = jnp.bfloat16

    xa = xa_ref[...]                          # (TB, 20) bf16
    x = xa[:, :INPUT_SIZE]                    # (TB, 14) bf16
    a = xa[:, INPUT_SIZE:]                    # (TB, 6)  bf16

    # --- frozen feature extractor: ReLU(L2(ReLU(L1(x)))) ---
    h1 = jnp.dot(x, w1_ref[...], preferred_element_type=f32) + b1_ref[...]
    h1 = jnp.maximum(h1, 0.0)
    feat = jnp.dot(h1.astype(bf16), w2_ref[...], preferred_element_type=f32) + b2_ref[...]
    feat = jnp.maximum(feat, 0.0)

    # --- new layer 0 on concat(features, additional), folded into two matmuls (exact) ---
    z = (jnp.dot(feat.astype(bf16), wn1f_ref[...], preferred_element_type=f32)
         + jnp.dot(a, wn1a_ref[...], preferred_element_type=f32)
         + bn1_ref[...])
    z = jnp.maximum(z, 0.0)

    # --- new layer 1 ---
    z = jnp.dot(z.astype(bf16), wn2_ref[...], preferred_element_type=f32) + bn2_ref[...]
    z = jnp.maximum(z, 0.0)

    # --- head (128 -> 1) on the VPU/XLU: multiply by the weight row and reduce over lanes ---
    logits = jnp.sum(z * wn3r_ref[...], axis=-1, keepdims=True) + bn3_ref[...]
    o_ref[...] = jax.nn.sigmoid(logits)


def transfer_custom_kinematic_net(x, additional_input, params, *, tb=1024):
    """x: (B, 14) f32, additional_input: (B, 6) f32 -> (B, 1) f32."""
    B = x.shape[0]

    # Fuse the two narrow input streams into one (B, 20) bf16 stream.
    xa = jnp.concatenate([x, additional_input], axis=-1).astype(jnp.bfloat16)

    # Batch tile: multiple of 16 (safe for bf16 sublane packing); pad B up to a multiple of TB.
    TB = min(tb, _round_up(B, 16))
    Bp = _round_up(B, TB)
    if Bp != B:
        xa = jnp.pad(xa, ((0, Bp - B), (0, 0)))

    weight_args = _prepare_kernel_params(params)

    in_specs = [pl.BlockSpec((TB, XA_DIM), lambda i: (i, 0))]
    # Weights/biases: full-shape blocks with a constant index_map -> DMA'd once, VMEM-resident.
    in_specs += [pl.BlockSpec(w.shape, lambda i: (0, 0)) for w in weight_args]

    out = pl.pallas_call(
        _kernel,
        out_shape=jax.ShapeDtypeStruct((Bp, 1), jnp.float32),
        grid=(Bp // TB,),
        in_specs=in_specs,
        out_specs=pl.BlockSpec((TB, 1), lambda i: (i, 0)),
        compiler_params=pltpu.CompilerParams(
            dimension_semantics=("parallel",),
            vmem_limit_bytes=32 * 1024 * 1024,
        ),
    )(xa, *weight_args)

    return out[:B] if Bp != B else out


def _reference(x, a, p):
    """Pure-JAX f32 reference of the original PyTorch forward."""
    h = jax.nn.relu(x @ p["w1"] + p["b1"])
    f = jax.nn.relu(h @ p["w2"] + p["b2"])
    combined = jnp.concatenate([f, a], axis=-1)
    wn1 = jnp.concatenate([p["wn1_feat"], p["wn1_add"]], axis=0)
    z = jax.nn.relu(combined @ wn1 + p["bn1"])
    z = jax.nn.relu(z @ p["wn2"] + p["bn2"])
    return jax.nn.sigmoid(z @ p["wn3"] + p["bn3"])


if __name__ == "__main__":
    key = jax.random.PRNGKey(0)
    kx, ka = jax.random.split(key)
    B = 8
    x = jax.random.normal(kx, (B, INPUT_SIZE), jnp.float32)
    add = jax.random.normal(ka, (B, ADD_INPUT_SIZE), jnp.float32)
    params = init_params(seed=0)

    out = transfer_custom_kinematic_net(x, add, params)
    out = jax.block_until_ready(out)

    ref = _reference(x, add, params)
    assert out.shape == (B, 1)
    # bf16 matmuls with f32 accumulation -> loosened tolerance vs the f32 reference.
    assert jnp.allclose(out, ref, atol=3e-2, rtol=3e-2)
    print("KERNEL_OK")
</pallas_src>

<mosaic_0001>
module attributes {stable_mosaic.version = 11 : i64} {
  func.func @_kernel(%arg0: i32, %arg1: memref<16x20xbf16, #tpu.memory_space<vmem>>, %arg2: memref<14x64xbf16, #tpu.memory_space<vmem>>, %arg3: memref<1x64xf32, #tpu.memory_space<vmem>>, %arg4: memref<64x64xbf16, #tpu.memory_space<vmem>>, %arg5: memref<1x64xf32, #tpu.memory_space<vmem>>, %arg6: memref<64x128xbf16, #tpu.memory_space<vmem>>, %arg7: memref<6x128xbf16, #tpu.memory_space<vmem>>, %arg8: memref<1x128xf32, #tpu.memory_space<vmem>>, %arg9: memref<128x128xbf16, #tpu.memory_space<vmem>>, %arg10: memref<1x128xf32, #tpu.memory_space<vmem>>, %arg11: memref<1x128xf32, #tpu.memory_space<vmem>>, %arg12: memref<1x1xf32, #tpu.memory_space<vmem>>, %arg13: memref<16x1xf32, #tpu.memory_space<vmem>>) attributes {dimension_semantics = [#tpu.dimension_semantics<parallel>], iteration_bounds = array<i64: 1>, scalar_prefetch = 0 : i64, scratch_operands = 0 : i64, tpu.core_type = #tpu.core_type<tc>, window_params = [{transform_indices = @transform_0, window_bounds = array<i64: 16, 20>}, {pipeline_mode = #tpu.pipeline_mode<synchronous>, transform_indices = @transform_1, window_bounds = array<i64: 14, 64>}, {pipeline_mode = #tpu.pipeline_mode<synchronous>, transform_indices = @transform_2, window_bounds = array<i64: 1, 64>}, {pipeline_mode = #tpu.pipeline_mode<synchronous>, transform_indices = @transform_3, window_bounds = array<i64: 64, 64>}, {pipeline_mode = #tpu.pipeline_mode<synchronous>, transform_indices = @transform_4, window_bounds = array<i64: 1, 64>}, {pipeline_mode = #tpu.pipeline_mode<synchronous>, transform_indices = @transform_5, window_bounds = array<i64: 64, 128>}, {pipeline_mode = #tpu.pipeline_mode<synchronous>, transform_indices = @transform_6, window_bounds = array<i64: 6, 128>}, {pipeline_mode = #tpu.pipeline_mode<synchronous>, transform_indices = @transform_7, window_bounds = array<i64: 1, 128>}, {pipeline_mode = #tpu.pipeline_mode<synchronous>, transform_indices = @transform_8, window_bounds = array<i64: 128, 128>}, {pipeline_mode = #tpu.pipeline_mode<synchronous>, transform_indices = @transform_9, window_bounds = array<i64: 1, 128>}, {pipeline_mode = #tpu.pipeline_mode<synchronous>, transform_indices = @transform_10, window_bounds = array<i64: 1, 128>}, {pipeline_mode = #tpu.pipeline_mode<synchronous>, transform_indices = @transform_11, window_bounds = array<i64: 1, 1>}, {transform_indices = @transform_12, window_bounds = array<i64: 16, 1>}]} {
    %c0 = arith.constant 0 : index
    %c0_0 = arith.constant 0 : index
    %0 = vector.load %arg1[%c0, %c0_0] : memref<16x20xbf16, #tpu.memory_space<vmem>>, vector<16x20xbf16>
    %1 = vector.extract_strided_slice %0 {offsets = [0, 0], sizes = [16, 14], strides = [1, 1]} : vector<16x20xbf16> to vector<16x14xbf16>
    %2 = vector.extract_strided_slice %0 {offsets = [0, 14], sizes = [16, 6], strides = [1, 1]} : vector<16x20xbf16> to vector<16x6xbf16>
    %c0_1 = arith.constant 0 : index
    %c0_2 = arith.constant 0 : index
    %3 = vector.load %arg2[%c0_1, %c0_2] : memref<14x64xbf16, #tpu.memory_space<vmem>>, vector<14x64xbf16>
    %cst = arith.constant dense<0.000000e+00> : vector<16x64xf32>
    %4 = tpu.matmul %1, %3, %cst {dimension_numbers = #tpu.dot_dimension_numbers<[1], [0], [0], [1], [0, 0, 1, 1], [], []>} : vector<16x14xbf16>, vector<14x64xbf16>, vector<16x64xf32> -> vector<16x64xf32>
    %c0_3 = arith.constant 0 : index
    %c0_4 = arith.constant 0 : index
    %5 = vector.load %arg3[%c0_3, %c0_4] : memref<1x64xf32, #tpu.memory_space<vmem>>, vector<1x64xf32>
    %6 = vector.broadcast %5 : vector<1x64xf32> to vector<16x64xf32>
    %7 = arith.addf %4, %6 : vector<16x64xf32>
    %cst_5 = arith.constant 0.000000e+00 : f32
    %8 = vector.broadcast %cst_5 : f32 to vector<16x64xf32>
    %9 = arith.maximumf %7, %8 : vector<16x64xf32>
    %10 = arith.truncf %9 : vector<16x64xf32> to vector<16x64xbf16>
    %c0_6 = arith.constant 0 : index
    %c0_7 = arith.constant 0 : index
    %11 = vector.load %arg4[%c0_6, %c0_7] : memref<64x64xbf16, #tpu.memory_space<vmem>>, vector<64x64xbf16>
    %cst_8 = arith.constant dense<0.000000e+00> : vector<16x64xf32>
    %12 = tpu.matmul %10, %11, %cst_8 {dimension_numbers = #tpu.dot_dimension_numbers<[1], [0], [0], [1], [0, 0, 1, 1], [], []>} : vector<16x64xbf16>, vector<64x64xbf16>, vector<16x64xf32> -> vector<16x64xf32>
    %c0_9 = arith.constant 0 : index
    %c0_10 = arith.constant 0 : index
    %13 = vector.load %arg5[%c0_9, %c0_10] : memref<1x64xf32, #tpu.memory_space<vmem>>, vector<1x64xf32>
    %14 = vector.broadcast %13 : vector<1x64xf32> to vector<16x64xf32>
    %15 = arith.addf %12, %14 : vector<16x64xf32>
    %cst_11 = arith.constant 0.000000e+00 : f32
    %16 = vector.broadcast %cst_11 : f32 to vector<16x64xf32>
    %17 = arith.maximumf %15, %16 : vector<16x64xf32>
    %18 = arith.truncf %17 : vector<16x64xf32> to vector<16x64xbf16>
    %c0_12 = arith.constant 0 : index
    %c0_13 = arith.constant 0 : index
    %19 = vector.load %arg6[%c0_12, %c0_13] : memref<64x128xbf16, #tpu.memory_space<vmem>>, vector<64x128xbf16>
    %cst_14 = arith.constant dense<0.000000e+00> : vector<16x128xf32>
    %20 = tpu.matmul %18, %19, %cst_14 {dimension_numbers = #tpu.dot_dimension_numbers<[1], [0], [0], [1], [0, 0, 1, 1], [], []>} : vector<16x64xbf16>, vector<64x128xbf16>, vector<16x128xf32> -> vector<16x128xf32>
    %c0_15 = arith.constant 0 : index
    %c0_16 = arith.constant 0 : index
    %21 = vector.load %arg7[%c0_15, %c0_16] : memref<6x128xbf16, #tpu.memory_space<vmem>>, vector<6x128xbf16>
    %cst_17 = arith.constant dense<0.000000e+00> : vector<16x128xf32>
    %22 = tpu.matmul %2, %21, %cst_17 {dimension_numbers = #tpu.dot_dimension_numbers<[1], [0], [0], [1], [0, 0, 1, 1], [], []>} : vector<16x6xbf16>, vector<6x128xbf16>, vector<16x128xf32> -> vector<16x128xf32>
    %23 = arith.addf %20, %22 : vector<16x128xf32>
    %c0_18 = arith.constant 0 : index
    %c0_19 = arith.constant 0 : index
    %24 = vector.load %arg8[%c0_18, %c0_19] : memref<1x128xf32, #tpu.memory_space<vmem>>, vector<1x128xf32>
    %25 = vector.broadcast %24 : vector<1x128xf32> to vector<16x128xf32>
    %26 = arith.addf %23, %25 : vector<16x128xf32>
    %cst_20 = arith.constant 0.000000e+00 : f32
    %27 = vector.broadcast %cst_20 : f32 to vector<16x128xf32>
    %28 = arith.maximumf %26, %27 : vector<16x128xf32>
    %29 = arith.truncf %28 : vector<16x128xf32> to vector<16x128xbf16>
    %c0_21 = arith.constant 0 : index
    %c0_22 = arith.constant 0 : index
    %30 = vector.load %arg9[%c0_21, %c0_22] : memref<128x128xbf16, #tpu.memory_space<vmem>>, vector<128x128xbf16>
    %cst_23 = arith.constant dense<0.000000e+00> : vector<16x128xf32>
    %31 = tpu.matmul %29, %30, %cst_23 {dimension_numbers = #tpu.dot_dimension_numbers<[1], [0], [0], [1], [0, 0, 1, 1], [], []>} : vector<16x128xbf16>, vector<128x128xbf16>, vector<16x128xf32> -> vector<16x128xf32>
    %c0_24 = arith.constant 0 : index
    %c0_25 = arith.constant 0 : index
    %32 = vector.load %arg10[%c0_24, %c0_25] : memref<1x128xf32, #tpu.memory_space<vmem>>, vector<1x128xf32>
    %33 = vector.broadcast %32 : vector<1x128xf32> to vector<16x128xf32>
    %34 = arith.addf %31, %33 : vector<16x128xf32>
    %cst_26 = arith.constant 0.000000e+00 : f32
    %35 = vector.broadcast %cst_26 : f32 to vector<16x128xf32>
    %36 = arith.maximumf %34, %35 : vector<16x128xf32>
    %c0_27 = arith.constant 0 : index
    %c0_28 = arith.constant 0 : index
    %37 = vector.load %arg11[%c0_27, %c0_28] : memref<1x128xf32, #tpu.memory_space<vmem>>, vector<1x128xf32>
    %38 = vector.broadcast %37 : vector<1x128xf32> to vector<16x128xf32>
    %39 = arith.mulf %36, %38 : vector<16x128xf32>
    %cst_29 = arith.constant dense<0.000000e+00> : vector<16xf32>
    %40 = vector.multi_reduction <add>, %39, %cst_29 [1] : vector<16x128xf32> to vector<16xf32>
    %41 = vector.shape_cast %40 : vector<16xf32> to vector<16x1xf32>
    %c0_30 = arith.constant 0 : index
    %c0_31 = arith.constant 0 : index
    %42 = vector.load %arg12[%c0_30, %c0_31] : memref<1x1xf32, #tpu.memory_space<vmem>>, vector<1x1xf32>
    %43 = vector.broadcast %42 : vector<1x1xf32> to vector<16x1xf32>
    %44 = arith.addf %41, %43 : vector<16x1xf32>
    %45 = arith.negf %44 : vector<16x1xf32>
    %46 = math.exp %45 : vector<16x1xf32>
    %cst_32 = arith.constant 1.000000e+00 : f32
    %47 = vector.broadcast %cst_32 : f32 to vector<16x1xf32>
    %48 = arith.addf %47, %46 : vector<16x1xf32>
    %49 = arith.divf %47, %48 : vector<16x1xf32>
    %c0_33 = arith.constant 0 : index
    %c0_34 = arith.constant 0 : index
    %50 = vector.load %arg13[%c0_33, %c0_34] : memref<16x1xf32, #tpu.memory_space<vmem>>, vector<16x1xf32>
    tpu.vector_store %arg13[%c0_33, %c0_34], %49 {strides = array<i32>} : memref<16x1xf32, #tpu.memory_space<vmem>>, vector<16x1xf32>,
    return
  }
  func.func @transform_0(%arg0: i32) -> (i32, i32) {
    %c0_i32 = arith.constant 0 : i32
    %c0_i32_0 = arith.constant 0 : i32
    return %arg0, %c0_i32 : i32, i32
  }
  func.func @transform_1(%arg0: i32) -> (i32, i32) {
    %c0_i32 = arith.constant 0 : i32
    %c0_i32_0 = arith.constant 0 : i32
    %c0_i32_1 = arith.constant 0 : i32
    return %c0_i32, %c0_i32_0 : i32, i32
  }
  func.func @transform_2(%arg0: i32) -> (i32, i32) {
    %c0_i32 = arith.constant 0 : i32
    %c0_i32_0 = arith.constant 0 : i32
    %c0_i32_1 = arith.constant 0 : i32
    return %c0_i32, %c0_i32_0 : i32, i32
  }
  func.func @transform_3(%arg0: i32) -> (i32, i32) {
    %c0_i32 = arith.constant 0 : i32
    %c0_i32_0 = arith.constant 0 : i32
    %c0_i32_1 = arith.constant 0 : i32
    return %c0_i32, %c0_i32_0 : i32, i32
  }
  func.func @transform_4(%arg0: i32) -> (i32, i32) {
    %c0_i32 = arith.constant 0 : i32
    %c0_i32_0 = arith.constant 0 : i32
    %c0_i32_1 = arith.constant 0 : i32
    return %c0_i32, %c0_i32_0 : i32, i32
  }
  func.func @transform_5(%arg0: i32) -> (i32, i32) {
    %c0_i32 = arith.constant 0 : i32
    %c0_i32_0 = arith.constant 0 : i32
    %c0_i32_1 = arith.constant 0 : i32
    return %c0_i32, %c0_i32_0 : i32, i32
  }
  func.func @transform_6(%arg0: i32) -> (i32, i32) {
    %c0_i32 = arith.constant 0 : i32
    %c0_i32_0 = arith.constant 0 : i32
    %c0_i32_1 = arith.constant 0 : i32
    return %c0_i32, %c0_i32_0 : i32, i32
  }
  func.func @transform_7(%arg0: i32) -> (i32, i32) {
    %c0_i32 = arith.constant 0 : i32
    %c0_i32_0 = arith.constant 0 : i32
    %c0_i32_1 = arith.constant 0 : i32
    return %c0_i32, %c0_i32_0 : i32, i32
  }
  func.func @transform_8(%arg0: i32) -> (i32, i32) {
    %c0_i32 = arith.constant 0 : i32
    %c0_i32_0 = arith.constant 0 : i32
    %c0_i32_1 = arith.constant 0 : i32
    return %c0_i32, %c0_i32_0 : i32, i32
  }
  func.func @transform_9(%arg0: i32) -> (i32, i32) {
    %c0_i32 = arith.constant 0 : i32
    %c0_i32_0 = arith.constant 0 : i32
    %c0_i32_1 = arith.constant 0 : i32
    return %c0_i32, %c0_i32_0 : i32, i32
  }
  func.func @transform_10(%arg0: i32) -> (i32, i32) {
    %c0_i32 = arith.constant 0 : i32
    %c0_i32_0 = arith.constant 0 : i32
    %c0_i32_1 = arith.constant 0 : i32
    return %c0_i32, %c0_i32_0 : i32, i32
  }
  func.func @transform_11(%arg0: i32) -> (i32, i32) {
    %c0_i32 = arith.constant 0 : i32
    %c0_i32_0 = arith.constant 0 : i32
    %c0_i32_1 = arith.constant 0 : i32
    return %c0_i32, %c0_i32_0 : i32, i32
  }
  func.func @transform_12(%arg0: i32) -> (i32, i32) {
    %c0_i32 = arith.constant 0 : i32
    %c0_i32_0 = arith.constant 0 : i32
    return %arg0, %c0_i32 : i32, i32
  }
}

</mosaic_0001>

<llo_original>
// kernel: tpu_custom_call.1
$region0: #{tpu_custom_call.1}
  #allocation0 [shape = 'u32[]', space=smem, size = 0x4, offset = 0x4, fixed_abs, tag = 'smem constant byte address 0x4 - core index']
  #allocation1 [shape = 'u32[144,128]{1,0:T(1,128)}', space=vmem, size = 0x12000, scoped, tag = 'internal scratch']
  #allocation2 [shape = 'f32[1,1]{1,0:T(1,128)S(1)}', space=vmem, size = 0x200, scoped, tag = 'scoped memory for tpu_custom_call.1']
  %s0 = inlined_call_operand.hbm [shape: bf16[16,20], index: 0, kind: input, shape index: {}]
  %s1 = inlined_call_operand.hbm [shape: bf16[14,64], index: 1, kind: input, shape index: {}]
  %s2 = inlined_call_operand.vmem [shape: f32[1,64], index: 2, kind: input, shape index: {}]
  %s3 = inlined_call_operand.hbm [shape: bf16[64,64], index: 3, kind: input, shape index: {}]
  %s4 = inlined_call_operand.vmem [shape: f32[1,64], index: 4, kind: input, shape index: {}]
  %s5 = inlined_call_operand.hbm [shape: bf16[64,128], index: 5, kind: input, shape index: {}]
  %s6 = inlined_call_operand.vmem [shape: bf16[6,128], index: 6, kind: input, shape index: {}]
  %s7 = inlined_call_operand.vmem [shape: f32[1,128], index: 7, kind: input, shape index: {}]
  %s8 = inlined_call_operand.hbm [shape: bf16[128,128], index: 8, kind: input, shape index: {}]
  %s9 = inlined_call_operand.vmem [shape: f32[1,128], index: 9, kind: input, shape index: {}]
  %s10 = inlined_call_operand.vmem [shape: f32[1,128], index: 10, kind: input, shape index: {}]
  %s11 = inlined_call_operand.<no memory space> [shape: f32[1,1], index: 11, kind: input, shape index: {}]
  %s12 = inlined_call_operand.vmem [shape: f32[16,1], index: 12, kind: output, shape index: {}]
  %s13 = sld [smem:[#allocation0]]
  $region78: #{tpu_custom_call.1} parent=0
    _
  %s15 = ssub.s32 1, %s13
  %s16 = scalar_select 0, %s15, %s13
  %v17 = vstv %s11
  %18 = vst [vmem:[#allocation2] sm:$0x1] %v17
  $region1: #{tpu_custom_call.1} parent=0
    #allocation3 [shape = 'u8[4096]{0}', space=vmem, size = 0x1000, scoped, tag = 'input window, operand 0, single buffered']
    #allocation4 [shape = 's32[1]{0}', space=sflag, size = 0x4, scoped, tag = 'scoped memory for tpu_custom_call.1']
    #allocation5 [shape = 'u8[4096]{0}', space=vmem, size = 0x1000, scoped, tag = 'input window, operand 1, single buffered']
    #allocation6 [shape = 's32[1]{0}', space=sflag, size = 0x4, scoped, tag = 'scoped memory for tpu_custom_call.1']
    #allocation7 [shape = 'u8[16384]{0}', space=vmem, size = 0x4000, scoped, tag = 'input window, operand 3, single buffered']
    #allocation8 [shape = 'u8[16384]{0}', space=vmem, size = 0x4000, scoped, tag = 'input window, operand 5, single buffered']
    #allocation9 [shape = 's32[1]{0}', space=sflag, size = 0x4, scoped, tag = 'scoped memory for tpu_custom_call.1']
    #allocation10 [shape = 'u8[32768]{0}', space=vmem, size = 0x8000, scoped, tag = 'input window, operand 8, single buffered']
    %19 = vsyncpa [#allocation4], 0
    %20 = vsyncpa [#allocation6], 0
    %21 = vsyncpa [#allocation9], 0
    // Predicated region
    $region2: #{tpu_custom_call.1} parent=1 // pred_check
      _
    $region3: #{tpu_custom_call.1} parent=1 // pred_check_branch
      %23 = sbr.rel (0) target = $region5
    $region4: #{tpu_custom_call.1} parent=1 // pred_region
      %s25 = ssub.s32 128, 128
      %26 = vsyncadd [#allocation4], %s25
      %s27 = sshll.u32 [#allocation3], 4
      %s28 = int_to_ptr.vmem [resolvable:$true] %s27
      %33 = dma.hbm_to_vmem [thread:$0]  %s0, 128, %s28, [#allocation4], 64, 64, 4
    $region5: #{tpu_custom_call.1} parent=1 // pred_fallthru
      _
    // Predicated region
    $region6: #{tpu_custom_call.1} parent=1 // pred_check
      _
    $region7: #{tpu_custom_call.1} parent=1 // pred_check_branch
      %35 = sbr.rel (0) target = $region9
    $region8: #{tpu_custom_call.1} parent=1 // pred_region
      %s37 = ssub.s32 128, 128
      %38 = vsyncadd [#allocation6], %s37
      %s39 = sshll.u32 [#allocation5], 4
      %s40 = int_to_ptr.vmem [resolvable:$true] %s39
      %45 = dma.hbm_to_vmem [thread:$0]  %s1, 128, %s40, [#allocation6], 64, 64, 4
    $region9: #{tpu_custom_call.1} parent=1 // pred_fallthru
      _
    // Predicated region
    $region10: #{tpu_custom_call.1} parent=1 // pred_check
      _
    $region11: #{tpu_custom_call.1} parent=1 // pred_check_branch
      %47 = sbr.rel (0) target = $region13
    $region12: #{tpu_custom_call.1} parent=1 // pred_region
      _
    $region13: #{tpu_custom_call.1} parent=1 // pred_fallthru
      _
    // Predicated region
    $region14: #{tpu_custom_call.1} parent=1 // pred_check
      _
    $region15: #{tpu_custom_call.1} parent=1 // pred_check_branch
      %49 = sbr.rel (0) target = $region17
    $region16: #{tpu_custom_call.1} parent=1 // pred_region
      %s51 = ssub.s32 512, 512
      %52 = vsyncadd [#allocation6], %s51
      %s53 = sshll.u32 [#allocation7], 4
      %s54 = int_to_ptr.vmem [resolvable:$true] %s53
      %59 = dma.hbm_to_vmem [thread:$0]  %s3, 512, %s54, [#allocation6], 64, 64, 4
    $region17: #{tpu_custom_call.1} parent=1 // pred_fallthru
      _
    // Predicated region
    $region18: #{tpu_custom_call.1} parent=1 // pred_check
      _
    $region19: #{tpu_custom_call.1} parent=1 // pred_check_branch
      %61 = sbr.rel (0) target = $region21
    $region20: #{tpu_custom_call.1} parent=1 // pred_region
      _
    $region21: #{tpu_custom_call.1} parent=1 // pred_fallthru
      _
    // Predicated region
    $region22: #{tpu_custom_call.1} parent=1 // pred_check
      _
    $region23: #{tpu_custom_call.1} parent=1 // pred_check_branch
      %63 = sbr.rel (0) target = $region25
    $region24: #{tpu_custom_call.1} parent=1 // pred_region
      %s65 = ssub.s32 512, 512
      %66 = vsyncadd [#allocation9], %s65
      %s67 = sshll.u32 [#allocation8], 4
      %s68 = int_to_ptr.vmem [resolvable:$true] %s67
      %73 = dma.hbm_to_vmem [thread:$0]  %s5, 512, %s68, [#allocation9], 64, 64, 4
    $region25: #{tpu_custom_call.1} parent=1 // pred_fallthru
      _
    // Predicated region
    $region26: #{tpu_custom_call.1} parent=1 // pred_check
      _
    $region27: #{tpu_custom_call.1} parent=1 // pred_check_branch
      %75 = sbr.rel (0) target = $region29
    $region28: #{tpu_custom_call.1} parent=1 // pred_region
      _
    $region29: #{tpu_custom_call.1} parent=1 // pred_fallthru
      _
    // Predicated region
    $region30: #{tpu_custom_call.1} parent=1 // pred_check
      _
    $region31: #{tpu_custom_call.1} parent=1 // pred_check_branch
      %77 = sbr.rel (0) target = $region33
    $region32: #{tpu_custom_call.1} parent=1 // pred_region
      _
    $region33: #{tpu_custom_call.1} parent=1 // pred_fallthru
      _
    // Predicated region
    $region34: #{tpu_custom_call.1} parent=1 // pred_check
      _
    $region35: #{tpu_custom_call.1} parent=1 // pred_check_branch
      %79 = sbr.rel (0) target = $region37
    $region36: #{tpu_custom_call.1} parent=1 // pred_region
      %s81 = ssub.s32 1024, 1024
      %82 = vsyncadd [#allocation9], %s81
      %s83 = sshll.u32 [#allocation10], 4
      %s84 = int_to_ptr.vmem [resolvable:$true] %s83
      %89 = dma.hbm_to_vmem [thread:$0]  %s8, 1024, %s84, [#allocation9], 64, 64, 4
    $region37: #{tpu_custom_call.1} parent=1 // pred_fallthru
      _
    // Predicated region
    $region38: #{tpu_custom_call.1} parent=1 // pred_check
      _
    $region39: #{tpu_custom_call.1} parent=1 // pred_check_branch
      %91 = sbr.rel (0) target = $region41
    $region40: #{tpu_custom_call.1} parent=1 // pred_region
      _
    $region41: #{tpu_custom_call.1} parent=1 // pred_fallthru
      _
    // Predicated region
    $region42: #{tpu_custom_call.1} parent=1 // pred_check
      _
    $region43: #{tpu_custom_call.1} parent=1 // pred_check_branch
      %93 = sbr.rel (0) target = $region45
    $region44: #{tpu_custom_call.1} parent=1 // pred_region
      _
    $region45: #{tpu_custom_call.1} parent=1 // pred_fallthru
      _
    // Predicated region
    $region46: #{tpu_custom_call.1} parent=1 // pred_check
      _
    $region47: #{tpu_custom_call.1} parent=1 // pred_check_branch
      %95 = sbr.rel (0) target = $region49
    $region48: #{tpu_custom_call.1} parent=1 // pred_region
      _
    $region49: #{tpu_custom_call.1} parent=1 // pred_fallthru
      _
    // Predicated region
    $region50: #{tpu_custom_call.1} parent=1 // pred_check
      _
    $region51: #{tpu_custom_call.1} parent=1 // pred_check_branch
      %97 = sbr.rel (0) target = $region53
    $region52: #{tpu_custom_call.1} parent=1 // pred_region
      %98 = dma.done [#allocation4], 128
    $region53: #{tpu_custom_call.1} parent=1 // pred_fallthru
      _
    // Predicated region
    $region54: #{tpu_custom_call.1} parent=1 // pred_check
      _
    $region55: #{tpu_custom_call.1} parent=1 // pred_check_branch
      %100 = sbr.rel (0) target = $region57
    $region56: #{tpu_custom_call.1} parent=1 // pred_region
      %101 = dma.done [#allocation6], 128
    $region57: #{tpu_custom_call.1} parent=1 // pred_fallthru
      _
    // Predicated region
    $region58: #{tpu_custom_call.1} parent=1 // pred_check
      _
    $region59: #{tpu_custom_call.1} parent=1 // pred_check_branch
      %103 = sbr.rel (0) target = $region61
    $region60: #{tpu_custom_call.1} parent=1 // pred_region
      %104 = dma.done [#allocation6], 512
    $region61: #{tpu_custom_call.1} parent=1 // pred_fallthru
      _
    // Predicated region
    $region62: #{tpu_custom_call.1} parent=1 // pred_check
      _
    $region63: #{tpu_custom_call.1} parent=1 // pred_check_branch
      %106 = sbr.rel (0) target = $region65
    $region64: #{tpu_custom_call.1} parent=1 // pred_region
      %107 = dma.done [#allocation9], 512
    $region65: #{tpu_custom_call.1} parent=1 // pred_fallthru
      _
    // Predicated region
    $region66: #{tpu_custom_call.1} parent=1 // pred_check
      _
    $region67: #{tpu_custom_call.1} parent=1 // pred_check_branch
      %109 = sbr.rel (0) target = $region69
    $region68: #{tpu_custom_call.1} parent=1 // pred_region
      %110 = dma.done [#allocation9], 1024
    $region69: #{tpu_custom_call.1} parent=1 // pred_fallthru
      _
    %v112 = vld [vmem:[#allocation3] sm:$0xf]
    %v113 = vld [vmem:[#allocation3 + $0x4] sm:$0xf]
    %v114 = vld [vmem:[#allocation5] sm:$0xf]
    %v115 = vld [vmem:[#allocation5 + $0x4] sm:$0x7]
    %v116 = vld [vmem:[%s2] sm:$0x1]
    %v118 = vlaneseq
    %v119 = vshrl.u32 %v118, 7
    %v120 = vsub.s32 0, %v119
    %v121 = vrot.slane %v116, %v120
    %v125 = vunpack.c.l.b16 %v112
    %v126 = vunpack.c.l.b16 %v113
    %v127 = vpack.c.b16 %v126, %v125
    %v130 = vunpack.c.l.b16 %v114
    %v131 = vunpack.c.l.b16 %v115
    %v132 = vpack.c.b16 %v131, %v130
    %vm133 = vcmask 113664
    %v135 = vsel %vm133, %v127, 0
    %vm137 = vcmask 1046528
    %v139 = vsel %vm137, %v132, 0
    %141 = vmatprep.subr.bf16.mxu0 0
    %142 = vmatpush1.bf16.msra.mxu0 0
    %143 = vmatprep.subr.bf16.mxu0 0
    %144 = vmatpush1.bf16.msra.mxu0 0
    %145 = vmatprep.subr.bf16.mxu0 0
    %146 = vmatpush1.bf16.msra.mxu0 0
    %147 = vmatprep.subr.bf16.mxu0 0
    %148 = vmatpush1.bf16.msra.mxu0 0
    %149 = vmatprep.subr.bf16.mxu0 0
    %150 = vmatpush1.bf16.msra.mxu0 0
    %151 = vmatprep.subr.bf16.mxu0 0
    %152 = vmatpush1.bf16.msra.mxu0 0
    %153 = vmatprep.subr.bf16.mxu0 0
    %154 = vmatpush1.bf16.msra.mxu0 0
    %155 = vmatprep.subr.bf16.mxu0 0
    %156 = vmatpush1.bf16.msra.mxu0 %v139
    %157 = vmatprep.subr.bf16.mxu0 0
    %158 = vmatpush2.bf16.msra.mxu0 0
    %159 = vmatprep.subr.bf16.mxu0 0
    %160 = vmatpush2.bf16.msra.mxu0 0
    %161 = vmatprep.subr.bf16.mxu0 0
    %162 = vmatpush2.bf16.msra.mxu0 0
    %163 = vmatprep.subr.bf16.mxu0 0
    %164 = vmatpush2.bf16.msra.mxu0 0
    %165 = vmatprep.subr.bf16.mxu0 0
    %166 = vmatpush2.bf16.msra.mxu0 0
    %167 = vmatprep.subr.bf16.mxu0 0
    %168 = vmatpush2.bf16.msra.mxu0 0
    %169 = vmatprep.subr.bf16.mxu0 0
    %170 = vmatpush2.bf16.msra.mxu0 0
    %171 = vmatprep.subr.bf16.mxu0 0
    %172 = vmatpush2.bf16.msra.mxu0 0
    %173 = vmatprep.mubr.bf16.mxu0 0
    %174 = vmatmul.mubr.bf16.gmra.mxu0 %v135
    %v175 = vpop.f32.mrf.mxu0
    %v176 = vadd.f32 %v121, %v175
    %v177 = vpop.f32.mrf.mxu0
    %v178 = vpop.f32.mrf.mxu0
    %v179 = vadd.f32 %v121, %v178
    %v180 = vpop.f32.mrf.mxu0
    %181 = vdwg.mxu0
    %v182 = vmax.f32 %v176, 0.0
    %v183 = vmax.f32 %v179, 0.0
    %v184 = vpack.c.bf16 %v183, %v182
    %v185 = vld [vmem:[#allocation7] sm:$0xf]
    %v186 = vld [vmem:[#allocation7 + $0x4] sm:$0xf]
    %v187 = vld [vmem:[#allocation7 + $0x8] sm:$0xf]
    %v188 = vld [vmem:[#allocation7 + $0xc] sm:$0xf]
    %v189 = vld [vmem:[#allocation7 + $0x10] sm:$0xf]
    %v190 = vld [vmem:[#allocation7 + $0x14] sm:$0xf]
    %v191 = vld [vmem:[#allocation7 + $0x18] sm:$0xf]
    %v192 = vld [vmem:[#allocation7 + $0x1c] sm:$0xf]
    %v193 = vld [vmem:[%s4] sm:$0x1]
    %v195 = vlaneseq
    %v196 = vshrl.u32 %v195, 7
    %v197 = vsub.s32 0, %v196
    %v198 = vrot.slane %v193, %v197
    %v208 = vunpack.c.l.b16 %v185
    %v209 = vunpack.c.l.b16 %v186
    %v210 = vunpack.c.l.b16 %v187
    %v211 = vunpack.c.l.b16 %v188
    %v212 = vunpack.c.l.b16 %v189
    %v213 = vunpack.c.l.b16 %v190
    %v214 = vunpack.c.l.b16 %v191
    %v215 = vunpack.c.l.b16 %v192
    %v216 = vpack.c.b16 %v209, %v208
    %v217 = vpack.c.b16 %v211, %v210
    %v218 = vpack.c.b16 %v213, %v212
    %v219 = vpack.c.b16 %v215, %v214
    %vm224 = vcmask 523264
    %v226 = vsel %vm224, %v184, 0
    %228 = vmatprep.subr.bf16.mxu0 0
    %229 = vmatpush1.bf16.msra.mxu0 0
    %230 = vmatprep.subr.bf16.mxu0 0
    %231 = vmatpush1.bf16.msra.mxu0 0
    %232 = vmatprep.subr.bf16.mxu0 0
    %233 = vmatpush1.bf16.msra.mxu0 0
    %234 = vmatprep.subr.bf16.mxu0 0
    %235 = vmatpush1.bf16.msra.mxu0 0
    %236 = vmatprep.subr.bf16.mxu0 0
    %237 = vmatpush1.bf16.msra.mxu0 %v219
    %238 = vmatprep.subr.bf16.mxu0 0
    %239 = vmatpush1.bf16.msra.mxu0 %v218
    %240 = vmatprep.subr.bf16.mxu0 0
    %241 = vmatpush1.bf16.msra.mxu0 %v217
    %242 = vmatprep.subr.bf16.mxu0 0
    %243 = vmatpush1.bf16.msra.mxu0 %v216
    %244 = vmatprep.subr.bf16.mxu0 0
    %245 = vmatpush2.bf16.msra.mxu0 0
    %246 = vmatprep.subr.bf16.mxu0 0
    %247 = vmatpush2.bf16.msra.mxu0 0
    %248 = vmatprep.subr.bf16.mxu0 0
    %249 = vmatpush2.bf16.msra.mxu0 0
    %250 = vmatprep.subr.bf16.mxu0 0
    %251 = vmatpush2.bf16.msra.mxu0 0
    %252 = vmatprep.subr.bf16.mxu0 0
    %253 = vmatpush2.bf16.msra.mxu0 0
    %254 = vmatprep.subr.bf16.mxu0 0
    %255 = vmatpush2.bf16.msra.mxu0 0
    %256 = vmatprep.subr.bf16.mxu0 0
    %257 = vmatpush2.bf16.msra.mxu0 0
    %258 = vmatprep.subr.bf16.mxu0 0
    %259 = vmatpush2.bf16.msra.mxu0 0
    %260 = vmatprep.mubr.bf16.mxu0 0
    %261 = vmatmul.mubr.bf16.gmra.mxu0 %v226
    %v262 = vpop.f32.mrf.mxu0
    %v263 = vadd.f32 %v198, %v262
    %v264 = vpop.f32.mrf.mxu0
    %v265 = vpop.f32.mrf.mxu0
    %v266 = vadd.f32 %v198, %v265
    %v267 = vpop.f32.mrf.mxu0
    %268 = vdwg.mxu0
    %v269 = vmax.f32 %v263, 0.0
    %v270 = vmax.f32 %v266, 0.0
    %v271 = vpack.c.bf16 %v270, %v269
    %v272 = vld [vmem:[#allocation8] sm:$0xf]
    %v273 = vld [vmem:[#allocation8 + $0x4] sm:$0xf]
    %v274 = vld [vmem:[#allocation8 + $0x8] sm:$0xf]
    %v275 = vld [vmem:[#allocation8 + $0xc] sm:$0xf]
    %v276 = vld [vmem:[#allocation8 + $0x10] sm:$0xf]
    %v277 = vld [vmem:[#allocation8 + $0x14] sm:$0xf]
    %v278 = vld [vmem:[#allocation8 + $0x18] sm:$0xf]
    %v279 = vld [vmem:[#allocation8 + $0x1c] sm:$0xf]
    %v280 = vld [vmem:[%s6] sm:$0x7]
    %281 = vrot.lane.b32.xlu0 %v127, 114
    %v282 = vpop.permute.xlu0 %281
    %vm283 = vcmask 48128
    %v285 = vsel %vm283, %v282, 0
    %vm287 = vcmask 1042432
    %v289 = vsel %vm287, %v280, 0
    %291 = vmatprep.subr.bf16.mxu0 0
    %292 = vmatpush1.bf16.msra.mxu0 0
    %293 = vmatprep.subr.bf16.mxu0 0
    %294 = vmatpush1.bf16.msra.mxu0 0
    %295 = vmatprep.subr.bf16.mxu0 0
    %296 = vmatpush1.bf16.msra.mxu0 0
    %297 = vmatprep.subr.bf16.mxu0 0
    %298 = vmatpush1.bf16.msra.mxu0 0
    %299 = vmatprep.subr.bf16.mxu0 0
    %300 = vmatpush1.bf16.msra.mxu0 0
    %301 = vmatprep.subr.bf16.mxu0 0
    %302 = vmatpush1.bf16.msra.mxu0 0
    %303 = vmatprep.subr.bf16.mxu0 0
    %304 = vmatpush1.bf16.msra.mxu0 0
    %305 = vmatprep.subr.bf16.mxu0 0
    %306 = vmatpush1.bf16.msra.mxu0 %v289
    %307 = vmatprep.subr.bf16.mxu0 0
    %308 = vmatpush2.bf16.msra.mxu0 0
    %309 = vmatprep.subr.bf16.mxu0 0
    %310 = vmatpush2.bf16.msra.mxu0 0
    %311 = vmatprep.subr.bf16.mxu0 0
    %312 = vmatpush2.bf16.msra.mxu0 0
    %313 = vmatprep.subr.bf16.mxu0 0
    %314 = vmatpush2.bf16.msra.mxu0 0
    %315 = vmatprep.subr.bf16.mxu0 0
    %316 = vmatpush2.bf16.msra.mxu0 0
    %317 = vmatprep.subr.bf16.mxu0 0
    %318 = vmatpush2.bf16.msra.mxu0 0
    %319 = vmatprep.subr.bf16.mxu0 0
    %320 = vmatpush2.bf16.msra.mxu0 0
    %321 = vmatprep.subr.bf16.mxu0 0
    %322 = vmatpush2.bf16.msra.mxu0 0
    %323 = vmatprep.mubr.bf16.mxu0 0
    %324 = vmatmul.mubr.bf16.gmra.mxu0 %v285
    %v325 = vpop.f32.mrf.mxu0
    %v326 = vadd.f32 0.0, %v325
    %v327 = vpop.f32.mrf.mxu0
    %v328 = vpop.f32.mrf.mxu0
    %v329 = vadd.f32 0.0, %v328
    %v330 = vpop.f32.mrf.mxu0
    %331 = vdwg.mxu0
    %v340 = vunpack.c.l.b16 %v272
    %v341 = vunpack.c.l.b16 %v273
    %v342 = vunpack.c.l.b16 %v274
    %v343 = vunpack.c.l.b16 %v275
    %v344 = vunpack.c.l.b16 %v276
    %v345 = vunpack.c.l.b16 %v277
    %v346 = vunpack.c.l.b16 %v278
    %v347 = vunpack.c.l.b16 %v279
    %v348 = vpack.c.b16 %v341, %v340
    %v349 = vpack.c.b16 %v343, %v342
    %v350 = vpack.c.b16 %v345, %v344
    %v351 = vpack.c.b16 %v347, %v346
    %v357 = vsel %vm224, %v271, 0
    %359 = vmatprep.subr.bf16.mxu0 0
    %360 = vmatpush1.bf16.msra.mxu0 0
    %361 = vmatprep.subr.bf16.mxu0 0
    %362 = vmatpush1.bf16.msra.mxu0 0
    %363 = vmatprep.subr.bf16.mxu0 0
    %364 = vmatpush1.bf16.msra.mxu0 0
    %365 = vmatprep.subr.bf16.mxu0 0
    %366 = vmatpush1.bf16.msra.mxu0 0
    %367 = vmatprep.subr.bf16.mxu0 0
    %368 = vmatpush1.bf16.msra.mxu0 %v351
    %369 = vmatprep.subr.bf16.mxu0 0
    %370 = vmatpush1.bf16.msra.mxu0 %v350
    %371 = vmatprep.subr.bf16.mxu0 0
    %372 = vmatpush1.bf16.msra.mxu0 %v349
    %373 = vmatprep.subr.bf16.mxu0 0
    %374 = vmatpush1.bf16.msra.mxu0 %v348
    %375 = vmatprep.subr.bf16.mxu0 0
    %376 = vmatpush2.bf16.msra.mxu0 0
    %377 = vmatprep.subr.bf16.mxu0 0
    %378 = vmatpush2.bf16.msra.mxu0 0
    %379 = vmatprep.subr.bf16.mxu0 0
    %380 = vmatpush2.bf16.msra.mxu0 0
    %381 = vmatprep.subr.bf16.mxu0 0
    %382 = vmatpush2.bf16.msra.mxu0 0
    %383 = vmatprep.subr.bf16.mxu0 0
    %384 = vmatpush2.bf16.msra.mxu0 0
    %385 = vmatprep.subr.bf16.mxu0 0
    %386 = vmatpush2.bf16.msra.mxu0 0
    %387 = vmatprep.subr.bf16.mxu0 0
    %388 = vmatpush2.bf16.msra.mxu0 0
    %389 = vmatprep.subr.bf16.mxu0 0
    %390 = vmatpush2.bf16.msra.mxu0 0
    %391 = vmatprep.mubr.bf16.mxu0 0
    %392 = vmatmul.mubr.bf16.gmra.mxu0 %v357
    %v393 = vpop.f32.mrf.mxu0
    %v394 = vadd.f32 %v326, %v393
    %v395 = vpop.f32.mrf.mxu0
    %v396 = vpop.f32.mrf.mxu0
    %v397 = vadd.f32 %v329, %v396
    %v398 = vpop.f32.mrf.mxu0
    %399 = vdwg.mxu0
    %v400 = vld [vmem:[%s7] sm:$0x1]
    %v402 = vlaneseq
    %v403 = vshrl.u32 %v402, 7
    %v404 = vsub.s32 0, %v403
    %v405 = vrot.slane %v400, %v404
    %v407 = vadd.f32 %v394, %v405
    %v408 = vadd.f32 %v397, %v405
    %v409 = vmax.f32 %v407, 0.0
    %v410 = vmax.f32 %v408, 0.0
    %v411 = vpack.c.bf16 %v410, %v409
    %v412 = vld [vmem:[#allocation10] sm:$0xf]
    %v413 = vld [vmem:[#allocation10 + $0x4] sm:$0xf]
    %v414 = vld [vmem:[#allocation10 + $0x8] sm:$0xf]
    %v415 = vld [vmem:[#allocation10 + $0xc] sm:$0xf]
    %v416 = vld [vmem:[#allocation10 + $0x10] sm:$0xf]
    %v417 = vld [vmem:[#allocation10 + $0x14] sm:$0xf]
    %v418 = vld [vmem:[#allocation10 + $0x18] sm:$0xf]
    %v419 = vld [vmem:[#allocation10 + $0x1c] sm:$0xf]
    %v420 = vld [vmem:[#allocation10 + $0x20] sm:$0xf]
    %v421 = vld [vmem:[#allocation10 + $0x24] sm:$0xf]
    %v422 = vld [vmem:[#allocation10 + $0x28] sm:$0xf]
    %v423 = vld [vmem:[#allocation10 + $0x2c] sm:$0xf]
    %v424 = vld [vmem:[#allocation10 + $0x30] sm:$0xf]
    %v425 = vld [vmem:[#allocation10 + $0x34] sm:$0xf]
    %v426 = vld [vmem:[#allocation10 + $0x38] sm:$0xf]
    %v427 = vld [vmem:[#allocation10 + $0x3c] sm:$0xf]
    %v428 = vld [vmem:[%s9] sm:$0x1]
    %v430 = vlaneseq
    %v431 = vshrl.u32 %v430, 7
    %v432 = vsub.s32 0, %v431
    %v433 = vrot.slane %v428, %v432
    %v451 = vunpack.c.l.b16 %v412
    %v452 = vunpack.c.l.b16 %v413
    %v453 = vunpack.c.l.b16 %v414
    %v454 = vunpack.c.l.b16 %v415
    %v455 = vunpack.c.l.b16 %v416
    %v456 = vunpack.c.l.b16 %v417
    %v457 = vunpack.c.l.b16 %v418
    %v458 = vunpack.c.l.b16 %v419
    %v459 = vunpack.c.l.b16 %v420
    %v460 = vunpack.c.l.b16 %v421
    %v461 = vunpack.c.l.b16 %v422
    %v462 = vunpack.c.l.b16 %v423
    %v463 = vunpack.c.l.b16 %v424
    %v464 = vunpack.c.l.b16 %v425
    %v465 = vunpack.c.l.b16 %v426
    %v466 = vunpack.c.l.b16 %v427
    %v467 = vpack.c.b16 %v452, %v451
    %v468 = vpack.c.b16 %v454, %v453
    %v469 = vpack.c.b16 %v456, %v455
    %v470 = vpack.c.b16 %v458, %v457
    %v471 = vpack.c.b16 %v460, %v459
    %v472 = vpack.c.b16 %v462, %v461
    %v473 = vpack.c.b16 %v464, %v463
    %v474 = vpack.c.b16 %v466, %v465
    %483 = vmatprep.subr.bf16.mxu0 0
    %484 = vmatpush1.bf16.msra.mxu0 %v474
    %485 = vmatprep.subr.bf16.mxu0 0
    %486 = vmatpush1.bf16.msra.mxu0 %v473
    %487 = vmatprep.subr.bf16.mxu0 0
    %488 = vmatpush1.bf16.msra.mxu0 %v472
    %489 = vmatprep.subr.bf16.mxu0 0
    %490 = vmatpush1.bf16.msra.mxu0 %v471
    %491 = vmatprep.subr.bf16.mxu0 0
    %492 = vmatpush1.bf16.msra.mxu0 %v470
    %493 = vmatprep.subr.bf16.mxu0 0
    %494 = vmatpush1.bf16.msra.mxu0 %v469
    %495 = vmatprep.subr.bf16.mxu0 0
    %496 = vmatpush1.bf16.msra.mxu0 %v468
    %497 = vmatprep.subr.bf16.mxu0 0
    %498 = vmatpush1.bf16.msra.mxu0 %v467
    %499 = vmatprep.subr.bf16.mxu0 0
    %500 = vmatpush2.bf16.msra.mxu0 0
    %501 = vmatprep.subr.bf16.mxu0 0
    %502 = vmatpush2.bf16.msra.mxu0 0
    %503 = vmatprep.subr.bf16.mxu0 0
    %504 = vmatpush2.bf16.msra.mxu0 0
    %505 = vmatprep.subr.bf16.mxu0 0
    %506 = vmatpush2.bf16.msra.mxu0 0
    %507 = vmatprep.subr.bf16.mxu0 0
    %508 = vmatpush2.bf16.msra.mxu0 0
    %509 = vmatprep.subr.bf16.mxu0 0
    %510 = vmatpush2.bf16.msra.mxu0 0
    %511 = vmatprep.subr.bf16.mxu0 0
    %512 = vmatpush2.bf16.msra.mxu0 0
    %513 = vmatprep.subr.bf16.mxu0 0
    %514 = vmatpush2.bf16.msra.mxu0 0
    %515 = vmatprep.mubr.bf16.mxu0 0
    %516 = vmatmul.mubr.bf16.gmra.mxu0 %v411
    %v517 = vpop.f32.mrf.mxu0
    %v518 = vadd.f32 %v433, %v517
    %v519 = vpop.f32.mrf.mxu0
    %v520 = vpop.f32.mrf.mxu0
    %v521 = vadd.f32 %v433, %v520
    %v522 = vpop.f32.mrf.mxu0
    %523 = vdwg.mxu0
    %v524 = vmax.f32 %v518, 0.0
    %v525 = vmax.f32 %v521, 0.0
    %v526 = vld [vmem:[%s10] sm:$0x1]
    %v528 = vlaneseq
    %v529 = vshrl.u32 %v528, 7
    %v530 = vsub.s32 0, %v529
    %v531 = vrot.slane %v526, %v530
    %v533 = vmul.f32 %v524, %v531
    %v534 = vmul.f32 %v525, %v531
    %535 = vadd.xlane.f32.xlu0 %v533
    %v536 = vpop.xlane.xlu0 %535
    %537 = vadd.xlane.f32.xlu0 %v534
    %v538 = vpop.xlane.xlu0 %537
    %v539 = vld [vmem:[#allocation2] sm:$0x1]
    %v541 = vlaneseq
    %v542 = vshrl.u32 %v541, 7
    %v543 = vsub.s32 0, %v542
    %v544 = vrot.slane %v539, %v543
    %v546 = vadd.f32 %v536, %v544
    %v547 = vadd.f32 %v538, %v544
    %v548 = vxor.u32 %v546, 2147483648
    %v549 = vxor.u32 %v547, 2147483648
    %v550 = vmul.f32 %v548, 1.442695
    %v551 = vpow.pop %v550
    %v552 = vmul.f32 %v549, 1.442695
    %v553 = vpow.pop %v552
    %v554 = vadd.f32 %v551, 1.0
    %v555 = vadd.f32 %v553, 1.0
    %v556 = vrcp.pop %v554
    %v557 = vmul.f32 1.0, %v556
    %v558 = vrcp.pop %v555
    %v559 = vmul.f32 1.0, %v558
    %vm560 = vcmask 7168
    %561 = vst.msk [vmem:[%s12] sm:$0xff] %vm560, %v557
    %562 = vst.msk [vmem:[%s12 + $0x8] sm:$0xff] %vm560, %v559
    // Predicated region
    $region70: #{tpu_custom_call.1} parent=1 // pred_check
      _
    $region71: #{tpu_custom_call.1} parent=1 // pred_check_branch
      %564 = sbr.rel (0) target = $region73
    $region72: #{tpu_custom_call.1} parent=1 // pred_region
      _
    $region73: #{tpu_custom_call.1} parent=1 // pred_fallthru
      _
    // Predicated region
    $region74: #{tpu_custom_call.1} parent=1 // pred_check
      _
    $region75: #{tpu_custom_call.1} parent=1 // pred_check_branch
      %566 = sbr.rel (0) target = $region77
    $region76: #{tpu_custom_call.1} parent=1 // pred_region
      _
    $region77: #{tpu_custom_call.1} parent=1 // pred_fallthru
      _
    %567 = vsyncpa [#allocation4], 1
    %568 = vsyncpa [#allocation6], 1
    %569 = vsyncpa [#allocation9], 1

</llo_original>
